<compile_context>
chip_gen: v5e
topology: v5e:2x2
jax: 0.10.0
libtpu: 0.0.40
codegen_flags: <defaults>
</compile_context>

<pallas_src>
import functools
import math

import jax
import jax.numpy as jnp
from jax.experimental import pallas as pl
from jax.experimental.pallas import tpu as pltpu

_LANE = 128


def _round_up(n, m):
    return ((n + m - 1) // m) * m


def _posdef_icnn_kernel(nhidden, seg_off, seg_w, eps, d, matmul_dtype, *refs):
    # refs = (x, W_all, b_all, U0_pos, ..., U{n-1}_pos, g0, out)
    x_ref, w_all_ref, b_all_ref = refs[0], refs[1], refs[2]
    u_refs = refs[3:-2]
    g0_ref = refs[-2]
    out_ref = refs[-1]

    xi = x_ref[...]                                                     # [TB, insize] f32

    # Single fused MXU call for every x-projection (+ all biases), f32 accumulate.
    px_all = jnp.dot(xi, w_all_ref[...],
                     preferred_element_type=jnp.float32) + b_all_ref[...]   # [TB, total_cols]

    # z1 = relu(inmap(x))   (segment 0, lane-tile aligned slice)
    z = jnp.maximum(px_all[:, seg_off[0]:seg_off[0] + seg_w[0]], 0.0)

    # z_{k+1} = relu(z_k @ relu(Uk) + x @ Wk + bk); relu(Uk) pre-hoisted in the wrapper.
    for k in range(nhidden):
        off, w = seg_off[k + 1], seg_w[k + 1]
        px = px_all[:, off:off + w]
        ux = jnp.dot(z.astype(matmul_dtype), u_refs[k][...],
                     preferred_element_type=jnp.float32)
        z = jnp.maximum(ux + px, 0.0)

    # PosDef head: ReHU(g(x) - g(0)) + eps * ||x||^2
    t = z - g0_ref[...]                                                 # [TB, OUTp]
    tp = jnp.maximum(t, 0.0)
    rehu = jnp.maximum(jnp.minimum(tp * tp * (0.5 / d), 0.5 * d), t - 0.5 * d)
    quad = eps * jnp.sum(xi * xi, axis=1, keepdims=True)                # [TB, 1] f32
    out_ref[...] = rehu + quad                                          # lane-dense store


def _icnn_g(xi, win, bin_, layers, matmul_dtype):
    """Pure-JAX ICNN g(.) with the same operand-dtype convention as the kernel.

    x-projections stay f32 (K = insize is tiny); z @ relu(U) uses matmul_dtype operands
    with f32 accumulation. Used for the one-time g(0) pre-pass and for the reference.
    """
    z = jnp.maximum(jnp.dot(xi, win, preferred_element_type=jnp.float32) + bin_, 0.0)
    for (w, b, u) in layers:
        px = jnp.dot(xi, w, preferred_element_type=jnp.float32) + b
        ux = jnp.dot(z.astype(matmul_dtype),
                     jnp.maximum(u, 0.0).astype(matmul_dtype),
                     preferred_element_type=jnp.float32)
        z = jnp.maximum(ux + px, 0.0)
    return z


def posdef_icnn_forward(x, params, eps=0.01, d=1.0,
                        matmul_dtype=jnp.float32, block_batch=128):
    batch, insize = x.shape
    win, bin_, layers = params["Win"], params["bin"], params["layers"]
    nhidden = len(layers)
    outsize = layers[-1][0].shape[1]
    H = win.shape[1]

    # ---- lane-aligned segment layout for the fused x-projection -------------
    widths = [H] + [lw.shape[1] for (lw, _, _) in layers]       # inmap, layer0..layer{n-1}
    padded = [_round_up(w, _LANE) for w in widths]
    offsets = [0]
    for p in padded[:-1]:
        offsets.append(offsets[-1] + p)
    total_cols = sum(padded)
    out_p = padded[-1]

    def pad_cols(a, wp):
        return jnp.pad(a, ((0, 0), (0, wp - a.shape[1])))

    w_segs = [pad_cols(win, padded[0])] + [pad_cols(layers[k][0], padded[k + 1])
                                           for k in range(nhidden)]
    b_segs = [pad_cols(bin_, padded[0])] + [pad_cols(layers[k][1], padded[k + 1])
                                            for k in range(nhidden)]
    w_all = jnp.concatenate(w_segs, axis=1).astype(jnp.float32)     # [insize, total_cols]
    b_all = jnp.concatenate(b_segs, axis=1).astype(jnp.float32)     # [1, total_cols]

    # Hoisted relu(U), zero-padded to lane/sublane-aligned shapes, cast for the MXU.
    u_pos = []
    for k in range(nhidden):
        u = jnp.maximum(layers[k][2], 0.0)
        u = jnp.pad(u, ((0, padded[k] - u.shape[0]), (0, padded[k + 1] - u.shape[1])))
        u_pos.append(u.astype(matmul_dtype))

    # g(0) depends only on weights/biases -> one-time tiny pre-pass, padded to 128 lanes.
    g0 = _icnn_g(jnp.zeros((1, insize), jnp.float32), win, bin_, layers, matmul_dtype)
    g0 = pad_cols(g0, out_p).astype(jnp.float32)                     # [1, OUTp]

    # ---- batch tiling (multiple of 8 sublanes; grid is "parallel") ----------
    tb = max(8, min(_round_up(block_batch, 8), _round_up(batch, 8)))
    padded_batch = _round_up(batch, tb)
    x_in = jnp.pad(x, ((0, padded_batch - batch), (0, 0))) if padded_batch != batch else x
    nblocks = padded_batch // tb

    flops = 2 * padded_batch * (insize * total_cols
                                + sum(padded[k] * padded[k + 1] for k in range(nhidden)))
    bytes_accessed = int(x_in.size * 4 + w_all.size * 4 + b_all.size * 4
                         + sum(u.size * u.dtype.itemsize for u in u_pos)
                         + g0.size * 4 + padded_batch * out_p * 4)
    cost = pl.CostEstimate(flops=flops, transcendentals=0, bytes_accessed=bytes_accessed)

    kernel = functools.partial(_posdef_icnn_kernel, nhidden,
                               tuple(offsets), tuple(padded), eps, d, matmul_dtype)

    const_spec = lambda shape: pl.BlockSpec(shape, lambda i: (0, 0))
    out = pl.pallas_call(
        kernel,
        out_shape=jax.ShapeDtypeStruct((padded_batch, out_p), jnp.float32),
        grid_spec=pltpu.PrefetchScalarGridSpec(
            num_scalar_prefetch=0,
            grid=(nblocks,),
            in_specs=[
                pl.BlockSpec((tb, insize), lambda i: (i, 0)),        # x tile (pipelined)
                const_spec((insize, total_cols)),                    # fused W (resident)
                const_spec((1, total_cols)),                         # fused b (resident)
            ] + [const_spec(u.shape) for u in u_pos]                 # relu(U) (resident)
              + [const_spec((1, out_p))],                            # g(0)
            out_specs=pl.BlockSpec((tb, out_p), lambda i: (i, 0)),   # lane-dense output
        ),
        compiler_params=pltpu.CompilerParams(dimension_semantics=("parallel",)),
        cost_estimate=cost,
    )(x_in, w_all, b_all, *u_pos, g0)

    return out[:batch, :outsize]


def init_params(key, insize, outsize, hsizes):
    """Deterministic torch.nn.Linear-style uniform init; weights stored as [in, out]."""
    assert len(set(hsizes)) == 1, "All hidden sizes should be equal"
    nhidden = len(hsizes)
    sizes = hsizes + [outsize]
    keys = jax.random.split(key, 2 + 3 * nhidden)
    ki = iter(keys)

    def uni(k, shape, fan_in):
        bound = 1.0 / math.sqrt(fan_in)
        return jax.random.uniform(k, shape, jnp.float32, -bound, bound)

    win = uni(next(ki), (insize, hsizes[0]), insize)          # inmap
    bin_ = uni(next(ki), (1, hsizes[0]), insize)
    layers = []
    for k in range(nhidden):
        out_k = sizes[k + 1]
        in_u = sizes[k]
        w = uni(next(ki), (insize, out_k), insize)            # linear[k]    (x  -> out_k)
        b = uni(next(ki), (1, out_k), insize)
        u = uni(next(ki), (in_u, out_k), in_u)                # poslinear[k] (z  -> out_k, no bias)
        layers.append((w, b, u))
    return {"Win": win, "bin": bin_, "layers": layers}


def ref_forward(x, params, eps=0.01, d=1.0, matmul_dtype=jnp.float32):
    """Pure-JAX reference (literal ReHU form). matmul_dtype mirrors the kernel's operand cast."""
    win, bin_, layers = params["Win"], params["bin"], params["layers"]
    zero = jnp.zeros((1, x.shape[1]), x.dtype)
    t = (_icnn_g(x, win, bin_, layers, matmul_dtype)
         - _icnn_g(zero, win, bin_, layers, matmul_dtype))
    rehu = jnp.maximum(jnp.clip(jnp.sign(t) * t * t / (2.0 * d), 0.0, d / 2.0),
                       t - d / 2.0)
    return rehu + eps * jnp.sum(x ** 2, axis=1, keepdims=True)


if __name__ == "__main__":
    insize, outsize, hsizes = 4, 4, [32, 32]
    batch = 128                 # two 64-row tiles -> exercises the parallel batch grid

    key = jax.random.PRNGKey(0)
    kp, kx = jax.random.split(key)
    params = init_params(kp, insize, outsize, hsizes)
    x = jax.random.normal(kx, (batch, insize), jnp.float32)

    # f32-operand path: must match the f32 reference tightly.
    out_f32 = jax.block_until_ready(
        posdef_icnn_forward(x, params, matmul_dtype=jnp.float32, block_batch=64))
    ref_f32 = ref_forward(x, params, matmul_dtype=jnp.float32)
    assert out_f32.shape == (batch, outsize), out_f32.shape
    assert jnp.allclose(out_f32, ref_f32, atol=1e-5, rtol=1e-5), (out_f32, ref_f32)

    # bf16-operand path for the z @ relu(U) matmuls (v6e/v7x MXU-native, f32 accumulation),
    # checked against a reference that applies the same operand quantization.
    out_bf16 = jax.block_until_ready(
        posdef_icnn_forward(x, params, matmul_dtype=jnp.bfloat16, block_batch=64))
    ref_bf16 = ref_forward(x, params, matmul_dtype=jnp.bfloat16)
    assert out_bf16.shape == (batch, outsize), out_bf16.shape
    assert jnp.allclose(out_bf16, ref_bf16, atol=1e-4, rtol=1e-4), (out_bf16, ref_bf16)

    print("KERNEL_OK")
</pallas_src>

<mosaic_0001>
module attributes {stable_mosaic.version = 11 : i64} {
  func.func @_posdef_icnn_kernel(%arg0: i32, %arg1: memref<64x4xf32, #tpu.memory_space<vmem>>, %arg2: memref<4x384xf32, #tpu.memory_space<vmem>>, %arg3: memref<1x384xf32, #tpu.memory_space<vmem>>, %arg4: memref<128x128xf32, #tpu.memory_space<vmem>>, %arg5: memref<128x128xf32, #tpu.memory_space<vmem>>, %arg6: memref<1x128xf32, #tpu.memory_space<vmem>>, %arg7: memref<64x128xf32, #tpu.memory_space<vmem>>) attributes {dimension_semantics = [#tpu.dimension_semantics<parallel>], iteration_bounds = array<i64: 2>, scalar_prefetch = 0 : i64, scratch_operands = 0 : i64, tpu.core_type = #tpu.core_type<tc>, window_params = [{transform_indices = @transform_0, window_bounds = array<i64: 64, 4>}, {pipeline_mode = #tpu.pipeline_mode<synchronous>, transform_indices = @transform_1, window_bounds = array<i64: 4, 384>}, {pipeline_mode = #tpu.pipeline_mode<synchronous>, transform_indices = @transform_2, window_bounds = array<i64: 1, 384>}, {pipeline_mode = #tpu.pipeline_mode<synchronous>, transform_indices = @transform_3, window_bounds = array<i64: 128, 128>}, {pipeline_mode = #tpu.pipeline_mode<synchronous>, transform_indices = @transform_4, window_bounds = array<i64: 128, 128>}, {pipeline_mode = #tpu.pipeline_mode<synchronous>, transform_indices = @transform_5, window_bounds = array<i64: 1, 128>}, {transform_indices = @transform_6, window_bounds = array<i64: 64, 128>}]} {
    %c0 = arith.constant 0 : index
    %c0_0 = arith.constant 0 : index
    %0 = vector.load %arg1[%c0, %c0_0] : memref<64x4xf32, #tpu.memory_space<vmem>>, vector<64x4xf32>
    %c0_1 = arith.constant 0 : index
    %c0_2 = arith.constant 0 : index
    %1 = vector.load %arg2[%c0_1, %c0_2] : memref<4x384xf32, #tpu.memory_space<vmem>>, vector<4x384xf32>
    %cst = arith.constant dense<0.000000e+00> : vector<64x384xf32>
    %2 = tpu.matmul %0, %1, %cst {dimension_numbers = #tpu.dot_dimension_numbers<[1], [0], [0], [1], [0, 0, 1, 1], [], []>} : vector<64x4xf32>, vector<4x384xf32>, vector<64x384xf32> -> vector<64x384xf32>
    %c0_3 = arith.constant 0 : index
    %c0_4 = arith.constant 0 : index
    %3 = vector.load %arg3[%c0_3, %c0_4] : memref<1x384xf32, #tpu.memory_space<vmem>>, vector<1x384xf32>
    %4 = vector.broadcast %3 : vector<1x384xf32> to vector<64x384xf32>
    %5 = arith.addf %2, %4 : vector<64x384xf32>
    %6 = vector.extract_strided_slice %5 {offsets = [0, 0], sizes = [64, 128], strides = [1, 1]} : vector<64x384xf32> to vector<64x128xf32>
    %cst_5 = arith.constant 0.000000e+00 : f32
    %7 = vector.broadcast %cst_5 : f32 to vector<64x128xf32>
    %8 = arith.maximumf %6, %7 : vector<64x128xf32>
    %9 = vector.extract_strided_slice %5 {offsets = [0, 128], sizes = [64, 128], strides = [1, 1]} : vector<64x384xf32> to vector<64x128xf32>
    %c0_6 = arith.constant 0 : index
    %c0_7 = arith.constant 0 : index
    %10 = vector.load %arg4[%c0_6, %c0_7] : memref<128x128xf32, #tpu.memory_space<vmem>>, vector<128x128xf32>
    %cst_8 = arith.constant dense<0.000000e+00> : vector<64x128xf32>
    %11 = tpu.matmul %8, %10, %cst_8 {dimension_numbers = #tpu.dot_dimension_numbers<[1], [0], [0], [1], [0, 0, 1, 1], [], []>} : vector<64x128xf32>, vector<128x128xf32>, vector<64x128xf32> -> vector<64x128xf32>
    %12 = arith.addf %11, %9 : vector<64x128xf32>
    %cst_9 = arith.constant 0.000000e+00 : f32
    %13 = vector.broadcast %cst_9 : f32 to vector<64x128xf32>
    %14 = arith.maximumf %12, %13 : vector<64x128xf32>
    %15 = vector.extract_strided_slice %5 {offsets = [0, 256], sizes = [64, 128], strides = [1, 1]} : vector<64x384xf32> to vector<64x128xf32>
    %c0_10 = arith.constant 0 : index
    %c0_11 = arith.constant 0 : index
    %16 = vector.load %arg5[%c0_10, %c0_11] : memref<128x128xf32, #tpu.memory_space<vmem>>, vector<128x128xf32>
    %cst_12 = arith.constant dense<0.000000e+00> : vector<64x128xf32>
    %17 = tpu.matmul %14, %16, %cst_12 {dimension_numbers = #tpu.dot_dimension_numbers<[1], [0], [0], [1], [0, 0, 1, 1], [], []>} : vector<64x128xf32>, vector<128x128xf32>, vector<64x128xf32> -> vector<64x128xf32>
    %18 = arith.addf %17, %15 : vector<64x128xf32>
    %cst_13 = arith.constant 0.000000e+00 : f32
    %19 = vector.broadcast %cst_13 : f32 to vector<64x128xf32>
    %20 = arith.maximumf %18, %19 : vector<64x128xf32>
    %c0_14 = arith.constant 0 : index
    %c0_15 = arith.constant 0 : index
    %21 = vector.load %arg6[%c0_14, %c0_15] : memref<1x128xf32, #tpu.memory_space<vmem>>, vector<1x128xf32>
    %22 = vector.broadcast %21 : vector<1x128xf32> to vector<64x128xf32>
    %23 = arith.subf %20, %22 : vector<64x128xf32>
    %cst_16 = arith.constant 0.000000e+00 : f32
    %24 = vector.broadcast %cst_16 : f32 to vector<64x128xf32>
    %25 = arith.maximumf %23, %24 : vector<64x128xf32>
    %26 = arith.mulf %25, %25 : vector<64x128xf32>
    %cst_17 = arith.constant 5.000000e-01 : f32
    %27 = vector.broadcast %cst_17 : f32 to vector<64x128xf32>
    %28 = arith.mulf %26, %27 : vector<64x128xf32>
    %cst_18 = arith.constant 5.000000e-01 : f32
    %29 = vector.broadcast %cst_18 : f32 to vector<64x128xf32>
    %30 = arith.minimumf %28, %29 : vector<64x128xf32>
    %cst_19 = arith.constant 5.000000e-01 : f32
    %31 = vector.broadcast %cst_19 : f32 to vector<64x128xf32>
    %32 = arith.subf %23, %31 : vector<64x128xf32>
    %33 = arith.maximumf %30, %32 : vector<64x128xf32>
    %34 = arith.mulf %0, %0 : vector<64x4xf32>
    %cst_20 = arith.constant dense<0.000000e+00> : vector<64xf32>
    %35 = vector.multi_reduction <add>, %34, %cst_20 [1] : vector<64x4xf32> to vector<64xf32>
    %36 = vector.shape_cast %35 : vector<64xf32> to vector<64x1xf32>
    %cst_21 = arith.constant 0.00999999977 : f32
    %37 = vector.broadcast %cst_21 : f32 to vector<64x1xf32>
    %38 = arith.mulf %37, %36 : vector<64x1xf32>
    %39 = vector.broadcast %38 : vector<64x1xf32> to vector<64x128xf32>
    %40 = arith.addf %33, %39 : vector<64x128xf32>
    %c0_22 = arith.constant 0 : index
    %c0_23 = arith.constant 0 : index
    %41 = vector.load %arg7[%c0_22, %c0_23] : memref<64x128xf32, #tpu.memory_space<vmem>>, vector<64x128xf32>
    tpu.vector_store %arg7[%c0_22, %c0_23], %40 {strides = array<i32>} : memref<64x128xf32, #tpu.memory_space<vmem>>, vector<64x128xf32>,
    return
  }
  func.func @transform_0(%arg0: i32) -> (i32, i32) {
    %c0_i32 = arith.constant 0 : i32
    %c0_i32_0 = arith.constant 0 : i32
    return %arg0, %c0_i32 : i32, i32
  }
  func.func @transform_1(%arg0: i32) -> (i32, i32) {
    %c0_i32 = arith.constant 0 : i32
    %c0_i32_0 = arith.constant 0 : i32
    %c0_i32_1 = arith.constant 0 : i32
    return %c0_i32, %c0_i32_0 : i32, i32
  }
  func.func @transform_2(%arg0: i32) -> (i32, i32) {
    %c0_i32 = arith.constant 0 : i32
    %c0_i32_0 = arith.constant 0 : i32
    %c0_i32_1 = arith.constant 0 : i32
    return %c0_i32, %c0_i32_0 : i32, i32
  }
  func.func @transform_3(%arg0: i32) -> (i32, i32) {
    %c0_i32 = arith.constant 0 : i32
    %c0_i32_0 = arith.constant 0 : i32
    %c0_i32_1 = arith.constant 0 : i32
    return %c0_i32, %c0_i32_0 : i32, i32
  }
  func.func @transform_4(%arg0: i32) -> (i32, i32) {
    %c0_i32 = arith.constant 0 : i32
    %c0_i32_0 = arith.constant 0 : i32
    %c0_i32_1 = arith.constant 0 : i32
    return %c0_i32, %c0_i32_0 : i32, i32
  }
  func.func @transform_5(%arg0: i32) -> (i32, i32) {
    %c0_i32 = arith.constant 0 : i32
    %c0_i32_0 = arith.constant 0 : i32
    %c0_i32_1 = arith.constant 0 : i32
    return %c0_i32, %c0_i32_0 : i32, i32
  }
  func.func @transform_6(%arg0: i32) -> (i32, i32) {
    %c0_i32 = arith.constant 0 : i32
    %c0_i32_0 = arith.constant 0 : i32
    return %arg0, %c0_i32 : i32, i32
  }
}

</mosaic_0001>

<llo_original>
// kernel: tpu_custom_call.1
$region0: #{tpu_custom_call.1}
  #allocation0 [shape = 'u32[]', space=smem, size = 0x4, offset = 0x4, fixed_abs, tag = 'smem constant byte address 0x4 - core index']
  #allocation1 [shape = 'u32[72,128]{1,0:T(1,128)}', space=vmem, size = 0x9000, scoped, tag = 'internal scratch']
  %s0 = inlined_call_operand.vmem [shape: f32[128,4], index: 0, kind: input, shape index: {}]
  %s1 = inlined_call_operand.hbm [shape: f32[4,384], index: 1, kind: input, shape index: {}]
  %s2 = inlined_call_operand.vmem [shape: f32[1,384], index: 2, kind: input, shape index: {}]
  %s3 = inlined_call_operand.vmem [shape: f32[128,128], index: 3, kind: input, shape index: {}]
  %s4 = inlined_call_operand.hbm [shape: f32[128,128], index: 4, kind: input, shape index: {}]
  %s5 = inlined_call_operand.vmem [shape: f32[1,128], index: 5, kind: input, shape index: {}]
  %s6 = inlined_call_operand.hbm [shape: f32[128,128], index: 6, kind: output, shape index: {}]
  %s7 = sld [smem:[#allocation0]]
  $region65: #{tpu_custom_call.1} parent=0
    _
  %s9 = ssub.s32 1, %s7
  %s10 = scalar_select 0, %s9, %s7
  $region1: #{tpu_custom_call.1} parent=0
    #allocation2 [shape = 'u8[6144]{0}', space=vmem, size = 0x1800, scoped, tag = 'input window, operand 1, single buffered']
    #allocation3 [shape = 's32[2]{0}', space=sflag, size = 0x8, scoped, tag = 'scoped memory for tpu_custom_call.1']
    #allocation4 [shape = 's32[2]{0}', space=sflag, size = 0x8, scoped, tag = 'scoped memory for tpu_custom_call.1']
    #allocation5 [shape = 'u8[65536]{0}', space=vmem, size = 0x10000, scoped, tag = 'input window, operand 4, single buffered']
    #allocation6 [shape = 's32[1]{0}', space=sflag, size = 0x4, scoped, tag = 'scoped memory for tpu_custom_call.1']
    #allocation7 [shape = 'u8[65536]{0}', space=vmem, size = 0x10000, scoped, tag = 'output window, operand 0']
    %11 = vsyncpa [#allocation3], 0
    %12 = vsyncpa [#allocation6], 0
    %13 = vsyncpa [#allocation4], 0
    %s14 = scalar_lea.sflag [#allocation4], 1
    %15 = vsyncpa %s14, 0
    loop: start=0, step=1, limit=4
    $region2: #{tpu_custom_call.1} parent=1 // loop_pre_header
      _
    $region3: #{tpu_custom_call.1} parent=1 // loop_header
      %s17 = sphi 0, %s21
      %p18 = scmp.ge.s32.totalorder %s17, 4
      %s27 = sphi 0, %s29
      %s30 = sphi 0, %s27
      %s31 = sphi 0, %s30
      %s47 = sphi 0, %s31
      %s51 = sphi 0, %s51
      %s53 = sphi 0, %s51
      %s54 = sphi 0, %s53
      %s68 = sphi 0, %s54
      %s72 = sphi 0, %s72
      %s74 = sphi 0, %s72
      %s75 = sphi 0, %s74
      %s89 = sphi 0, %s75
      %s93 = sphi 0, %s93
      %s95 = sphi 0, %s93
      %s96 = sphi 0, %s95
      %s110 = sphi 0, %s96
      %s114 = sphi 0, %s114
      %s116 = sphi 0, %s114
      %s117 = sphi 0, %s116
      %s131 = sphi 0, %s117
      %s135 = sphi 0, %s135
      %s137 = sphi 0, %s135
      %s138 = sphi 0, %s137
      %s152 = sphi 0, %s138
      %s158 = sphi 0, %s160
      %s161 = sphi 0, %s158
      %s162 = sphi 0, %s161
      %s178 = sphi 0, %s162
    $region4: #{tpu_custom_call.1} parent=1 // loop_header_branch
      %20 = sbr.rel (%p18) target = $region8
    $region5: #{tpu_custom_call.1} parent=1 // loop_body
      %s22 = ssub.s32 %s17, 1
      %s23 = ssub.s32 %s17, 2
      %s24 = sadd.s32 %s17, 1
      %s25 = ssub.s32 %s17, %s24
      %p26 = scmp.eq.s32.totalorder %s25, 0
      %s28 = sadd.s32 %s27, 1
      %s29 = scalar_select %p26, %s27, %s28
      %p32 = pneg %p26
      %p33 = scmp.eq.s32.totalorder %s17, 1
      %p34 = por %p32, %p33
      %p35 = scmp.ne.s32.totalorder %s27, %s30
      %p36 = scmp.eq.s32.totalorder %s17, 0
      %p37 = por %p35, %p36
      %p38 = scmp.ne.s32.totalorder %s27, %s30
      %p39 = scmp.eq.s32.totalorder %s22, 1
      %p40 = por %p38, %p39
      %p41 = scmp.ne.s32.totalorder %s30, %s31
      %p42 = scmp.eq.s32.totalorder %s22, 0
      %p43 = por %p41, %p42
      %p44 = scmp.ne.s32.totalorder %s30, %s31
      %p45 = scmp.eq.s32.totalorder %s23, 1
      %p46 = por %p44, %p45
      %p48 = scmp.ne.s32.totalorder %s31, %s47
      %p49 = scmp.eq.s32.totalorder %s23, 0
      %p50 = por %p48, %p49
      %s52 = sadd.s32 %s51, 1
      %p55 = scmp.eq.s32.totalorder %s17, 1
      %p56 = scmp.ne.s32.totalorder %s51, %s53
      %p57 = scmp.eq.s32.totalorder %s17, 0
      %p58 = por %p56, %p57
      %p59 = scmp.ne.s32.totalorder %s51, %s53
      %p60 = scmp.eq.s32.totalorder %s22, 1
      %p61 = por %p59, %p60
      %p62 = scmp.ne.s32.totalorder %s53, %s54
      %p63 = scmp.eq.s32.totalorder %s22, 0
      %p64 = por %p62, %p63
      %p65 = scmp.ne.s32.totalorder %s53, %s54
      %p66 = scmp.eq.s32.totalorder %s23, 1
      %p67 = por %p65, %p66
      %p69 = scmp.ne.s32.totalorder %s54, %s68
      %p70 = scmp.eq.s32.totalorder %s23, 0
      %p71 = por %p69, %p70
      %s73 = sadd.s32 %s72, 1
      %p76 = scmp.eq.s32.totalorder %s17, 1
      %p77 = scmp.ne.s32.totalorder %s72, %s74
      %p78 = scmp.eq.s32.totalorder %s17, 0
      %p79 = por %p77, %p78
      %p80 = scmp.ne.s32.totalorder %s72, %s74
      %p81 = scmp.eq.s32.totalorder %s22, 1
      %p82 = por %p80, %p81
      %p83 = scmp.ne.s32.totalorder %s74, %s75
      %p84 = scmp.eq.s32.totalorder %s22, 0
      %p85 = por %p83, %p84
      %p86 = scmp.ne.s32.totalorder %s74, %s75
      %p87 = scmp.eq.s32.totalorder %s23, 1
      %p88 = por %p86, %p87
      %p90 = scmp.ne.s32.totalorder %s75, %s89
      %p91 = scmp.eq.s32.totalorder %s23, 0
      %p92 = por %p90, %p91
      %s94 = sadd.s32 %s93, 1
      %p97 = scmp.eq.s32.totalorder %s17, 1
      %p98 = scmp.ne.s32.totalorder %s93, %s95
      %p99 = scmp.eq.s32.totalorder %s17, 0
      %p100 = por %p98, %p99
      %p101 = scmp.ne.s32.totalorder %s93, %s95
      %p102 = scmp.eq.s32.totalorder %s22, 1
      %p103 = por %p101, %p102
      %p104 = scmp.ne.s32.totalorder %s95, %s96
      %p105 = scmp.eq.s32.totalorder %s22, 0
      %p106 = por %p104, %p105
      %p107 = scmp.ne.s32.totalorder %s95, %s96
      %p108 = scmp.eq.s32.totalorder %s23, 1
      %p109 = por %p107, %p108
      %p111 = scmp.ne.s32.totalorder %s96, %s110
      %p112 = scmp.eq.s32.totalorder %s23, 0
      %p113 = por %p111, %p112
      %s115 = sadd.s32 %s114, 1
      %p118 = scmp.eq.s32.totalorder %s17, 1
      %p119 = scmp.ne.s32.totalorder %s114, %s116
      %p120 = scmp.eq.s32.totalorder %s17, 0
      %p121 = por %p119, %p120
      %p122 = scmp.ne.s32.totalorder %s114, %s116
      %p123 = scmp.eq.s32.totalorder %s22, 1
      %p124 = por %p122, %p123
      %p125 = scmp.ne.s32.totalorder %s116, %s117
      %p126 = scmp.eq.s32.totalorder %s22, 0
      %p127 = por %p125, %p126
      %p128 = scmp.ne.s32.totalorder %s116, %s117
      %p129 = scmp.eq.s32.totalorder %s23, 1
      %p130 = por %p128, %p129
      %p132 = scmp.ne.s32.totalorder %s117, %s131
      %p133 = scmp.eq.s32.totalorder %s23, 0
      %p134 = por %p132, %p133
      %s136 = sadd.s32 %s135, 1
      %p139 = scmp.eq.s32.totalorder %s17, 1
      %p140 = scmp.ne.s32.totalorder %s135, %s137
      %p141 = scmp.eq.s32.totalorder %s17, 0
      %p142 = por %p140, %p141
      %p143 = scmp.ne.s32.totalorder %s135, %s137
      %p144 = scmp.eq.s32.totalorder %s22, 1
      %p145 = por %p143, %p144
      %p146 = scmp.ne.s32.totalorder %s137, %s138
      %p147 = scmp.eq.s32.totalorder %s22, 0
      %p148 = por %p146, %p147
      %p149 = scmp.ne.s32.totalorder %s137, %s138
      %p150 = scmp.eq.s32.totalorder %s23, 1
      %p151 = por %p149, %p150
      %p153 = scmp.ne.s32.totalorder %s138, %s152
      %p154 = scmp.eq.s32.totalorder %s23, 0
      %p155 = por %p153, %p154
      %s156 = ssub.s32 %s17, %s24
      %p157 = scmp.eq.s32.totalorder %s156, 0
      %s159 = sadd.s32 %s158, 1
      %s160 = scalar_select %p157, %s158, %s159
      %p163 = pneg %p157
      %p164 = scmp.eq.s32.totalorder %s17, 1
      %p165 = por %p163, %p164
      %p166 = scmp.ne.s32.totalorder %s158, %s161
      %p167 = scmp.eq.s32.totalorder %s17, 0
      %p168 = por %p166, %p167
      %p169 = scmp.ne.s32.totalorder %s158, %s161
      %p170 = scmp.eq.s32.totalorder %s22, 1
      %p171 = por %p169, %p170
      %p172 = scmp.ne.s32.totalorder %s161, %s162
      %p173 = scmp.eq.s32.totalorder %s22, 0
      %p174 = por %p172, %p173
      %p175 = scmp.ne.s32.totalorder %s161, %s162
      %p176 = scmp.eq.s32.totalorder %s23, 1
      %p177 = por %p175, %p176
      %p179 = scmp.ne.s32.totalorder %s162, %s178
      %p180 = scmp.eq.s32.totalorder %s23, 0
      %p181 = por %p179, %p180
      %p182 = scmp.le.s32.totalorder 1, %s17
      %p183 = scmp.lt.s32.totalorder %s17, 3
      %p184 = pnand %p182, %p183
      %p185 = pneg %p184
      // Predicated region
      $region9: #{tpu_custom_call.1} parent=5 // pred_check
        _
      $region10: #{tpu_custom_call.1} parent=5 // pred_check_branch
        %187 = sbr.rel (%p184) target = $region12
      $region11: #{tpu_custom_call.1} parent=5 // pred_region
        %s188 = ssub.s32 %s17, 1
        // Predicated region
        $region13: #{tpu_custom_call.1} parent=11 // pred_check
          %p189 = pneg %p64
        $region14: #{tpu_custom_call.1} parent=11 // pred_check_branch
          %191 = sbr.rel (%p189) target = $region16
        $region15: #{tpu_custom_call.1} parent=11 // pred_region
          %193 = vsyncadd [#allocation3], 0
          %s195 = sshll.u32 %s1, 4
          %s196 = int_to_ptr.hbm [resolvable:$true] %s195
          %s197 = sshll.u32 [#allocation2], 4
          %s198 = int_to_ptr.vmem [resolvable:$true] %s197
          %200 = dma.hbm_to_vmem [thread:$0]  %s196, 192, %s198, [#allocation3]
        $region16: #{tpu_custom_call.1} parent=11 // pred_fallthru
          _
        // Predicated region
        $region17: #{tpu_custom_call.1} parent=11 // pred_check
          %p201 = pneg %p85
        $region18: #{tpu_custom_call.1} parent=11 // pred_check_branch
          %203 = sbr.rel (%p201) target = $region20
        $region19: #{tpu_custom_call.1} parent=11 // pred_region
          _
        $region20: #{tpu_custom_call.1} parent=11 // pred_fallthru
          _
        // Predicated region
        $region21: #{tpu_custom_call.1} parent=11 // pred_check
          %p204 = pneg %p106
        $region22: #{tpu_custom_call.1} parent=11 // pred_check_branch
          %206 = sbr.rel (%p204) target = $region24
        $region23: #{tpu_custom_call.1} parent=11 // pred_region
          _
        $region24: #{tpu_custom_call.1} parent=11 // pred_fallthru
          _
        // Predicated region
        $region25: #{tpu_custom_call.1} parent=11 // pred_check
          %p207 = pneg %p127
        $region26: #{tpu_custom_call.1} parent=11 // pred_check_branch
          %209 = sbr.rel (%p207) target = $region28
        $region27: #{tpu_custom_call.1} parent=11 // pred_region
          %211 = vsyncadd [#allocation6], 0
          %s212 = sshll.u32 %s4, 4
          %s213 = int_to_ptr.hbm [resolvable:$true] %s212
          %s214 = sshll.u32 [#allocation5], 4
          %s215 = int_to_ptr.vmem [resolvable:$true] %s214
          %220 = dma.hbm_to_vmem [thread:$0]  %s213, 2048, %s215, [#allocation6], 128, 128, 8
        $region28: #{tpu_custom_call.1} parent=11 // pred_fallthru
          _
        // Predicated region
        $region29: #{tpu_custom_call.1} parent=11 // pred_check
          %p221 = pneg %p148
        $region30: #{tpu_custom_call.1} parent=11 // pred_check_branch
          %223 = sbr.rel (%p221) target = $region32
        $region31: #{tpu_custom_call.1} parent=11 // pred_region
          _
        $region32: #{tpu_custom_call.1} parent=11 // pred_fallthru
          _
      $region12: #{tpu_custom_call.1} parent=5 // pred_fallthru
        _
      %p224 = scmp.lt.s32.totalorder %s17, 2
      // Predicated region
      $region33: #{tpu_custom_call.1} parent=5 // pred_check
        %p225 = pneg %p224
      $region34: #{tpu_custom_call.1} parent=5 // pred_check_branch
        %227 = sbr.rel (%p225) target = $region36
      $region35: #{tpu_custom_call.1} parent=5 // pred_region
        // Predicated region
        $region37: #{tpu_custom_call.1} parent=35 // pred_check
          %p228 = pneg %p37
        $region38: #{tpu_custom_call.1} parent=35 // pred_check_branch
          %230 = sbr.rel (%p228) target = $region40
        $region39: #{tpu_custom_call.1} parent=35 // pred_region
          %s231 = smul.u32 8, %s17
          %p232 = scmp.lt.s32.totalorder %s231, 15
          %s233 = scalar_select %p232, %s231, 15
          %s234 = smul.addr %s233, 8
          %s235 = scalar_lea.vmem %s0, %s234
          %s236 = smul.u32 8, %s17
        $region40: #{tpu_custom_call.1} parent=35 // pred_fallthru
          _
      $region36: #{tpu_custom_call.1} parent=5 // pred_fallthru
        _
      %p237 = scmp.le.s32.totalorder 1, %s17
      %p238 = scmp.lt.s32.totalorder %s17, 3
      %p239 = pnand %p237, %p238
      %p240 = pneg %p239
      // Predicated region
      $region41: #{tpu_custom_call.1} parent=5 // pred_check
        _
      $region42: #{tpu_custom_call.1} parent=5 // pred_check_branch
        %242 = sbr.rel (%p239) target = $region44
      $region43: #{tpu_custom_call.1} parent=5 // pred_region
        %s243 = ssub.s32 %s17, 1
        // Predicated region
        $region45: #{tpu_custom_call.1} parent=43 // pred_check
          %p244 = pneg %p64
        $region46: #{tpu_custom_call.1} parent=43 // pred_check_branch
          %246 = sbr.rel (%p244) target = $region48
        $region47: #{tpu_custom_call.1} parent=43 // pred_region
          %248 = dma.done [#allocation3], 192
        $region48: #{tpu_custom_call.1} parent=43 // pred_fallthru
          _
        // Predicated region
        $region49: #{tpu_custom_call.1} parent=43 // pred_check
          %p249 = pneg %p127
        $region50: #{tpu_custom_call.1} parent=43 // pred_check_branch
          %251 = sbr.rel (%p249) target = $region52
        $region51: #{tpu_custom_call.1} parent=43 // pred_region
          %253 = dma.done [#allocation6], 2048
        $region52: #{tpu_custom_call.1} parent=43 // pred_fallthru
          _
        %s254 = smul.u32 8, %s22
        %p255 = scmp.lt.s32.totalorder %s254, 15
        %s256 = scalar_select %p255, %s254, 15
        %s257 = smul.addr %s256, 8
        %s258 = scalar_lea.vmem %s0, %s257
        %p259 = pneg %p43
        %p260 = pneg %p40
        %p261 = pneg %p64
        %p262 = pneg %p61
        %p263 = pneg %p85
        %p264 = pneg %p82
        %p265 = pneg %p106
        %p266 = pneg %p103
        %p267 = pneg %p127
        %p268 = pneg %p124
        %p269 = pneg %p148
        %p270 = pneg %p145
        %p271 = pneg %p174
        %p272 = pneg %p171
        %s273 = sand.u32 %s161, 1
        %s274 = scalar_lea.sflag [#allocation4], %s273
        %s275 = sand.u32 %s161, 1
        %s276 = smul.addr %s275, 64
        %s277 = scalar_lea.vmem [#allocation7], %s276
        %s278 = smul.u32 8, %s22
        %p279 = scmp.lt.s32.totalorder %s278, 15
        %s280 = scalar_select %p279, %s278, 15
        %s281 = smul.addr %s280, 8
        %s282 = scalar_lea.vmem %s0, %s281
        %s283 = smul.u32 8, %s22
        %s284 = smul.u32 8, %s22
        %v285 = vld [vmem:[%s282] sm:$0xff]
        %v286 = vld [vmem:[%s282 + $0x8] sm:$0xff]
        %v287 = vld [vmem:[%s282 + $0x10] sm:$0xff]
        %v288 = vld [vmem:[%s282 + $0x18] sm:$0xff]
        %v289 = vld [vmem:[%s282 + $0x20] sm:$0xff]
        %v290 = vld [vmem:[%s282 + $0x28] sm:$0xff]
        %v291 = vld [vmem:[%s282 + $0x30] sm:$0xff]
        %v292 = vld [vmem:[%s282 + $0x38] sm:$0xff]
        %v293 = vld [vmem:[#allocation2] sm:$0xff]
        %v294 = vld [vmem:[#allocation2 + $0x8] sm:$0xf]
        %v295 = vld [vmem:[%s2] sm:$0x7]
        %v297 = vperm.slane %v295, 0
        %v298 = vperm.slane %v295, 1
        %v299 = vperm.slane %v295, 2
        %305 = vst [vmem:[#allocation1] ss:$2 sm:$0xff] %v293
        %s306 = scalar_lea.vmem [#allocation1], 16
        %307 = vst [vmem:[%s306] ss:$2 sm:$0xff] %v294
        %v308 = vld.sshfl [vmem:[#allocation1] sm:$0xff pattern:$0x75316420]
        %v309 = vld.sshfl [vmem:[#allocation1 + $0x8] sm:$0xff pattern:$0x75316420]
        %v310 = vld.sshfl [vmem:[#allocation1 + $0x10] sm:$0xff pattern:$0x75316420]
        %vm311 = vcmask 31744
        %v313 = vsel %vm311, %v285, 0
        %v316 = vsel %vm311, %v286, 0
        %v319 = vsel %vm311, %v287, 0
        %v322 = vsel %vm311, %v288, 0
        %v325 = vsel %vm311, %v289, 0
        %v328 = vsel %vm311, %v290, 0
        %v331 = vsel %vm311, %v291, 0
        %v334 = vsel %vm311, %v292, 0
        %vm336 = vcmask 1043456
        %v337 = vsel %vm336, %v308, 0
        %v339 = vsel %vm336, %v309, 0
        %v341 = vsel %vm336, %v310, 0
        %343 = vmatpush.msra.mxu0 0.0
        %344 = vmatpush.msra.mxu0 0.0
        %345 = vmatpush.msra.mxu0 0.0
        %346 = vmatpush.msra.mxu0 0.0
        %347 = vmatpush.msra.mxu0 0.0
        %348 = vmatpush.msra.mxu0 0.0
        %349 = vmatpush.msra.mxu0 0.0
        %350 = vmatpush.msra.mxu0 0.0
        %351 = vmatpush.msra.mxu0 0.0
        %352 = vmatpush.msra.mxu0 0.0
        %353 = vmatpush.msra.mxu0 0.0
        %354 = vmatpush.msra.mxu0 0.0
        %355 = vmatpush.msra.mxu0 0.0
        %356 = vmatpush.msra.mxu0 0.0
        %357 = vmatpush.msra.mxu0 0.0
        %358 = vmatpush.msra.mxu0 %v337
        %359 = vmatmul.f32.gmra.mxu0 %v313
        %v360 = vpop.f32.mrf.mxu0
        %v361 = vadd.f32 %v297, %v360
        %362 = vmatmul.f32.gmra.mxu0 %v316
        %v363 = vpop.f32.mrf.mxu0
        %v364 = vadd.f32 %v297, %v363
        %365 = vmatmul.f32.gmra.mxu0 %v319
        %v366 = vpop.f32.mrf.mxu0
        %v367 = vadd.f32 %v297, %v366
        %368 = vmatmul.f32.gmra.mxu0 %v322
        %v369 = vpop.f32.mrf.mxu0
        %v370 = vadd.f32 %v297, %v369
        %371 = vmatmul.f32.gmra.mxu0 %v325
        %v372 = vpop.f32.mrf.mxu0
        %v373 = vadd.f32 %v297, %v372
        %374 = vmatmul.f32.gmra.mxu0 %v328
        %v375 = vpop.f32.mrf.mxu0
        %v376 = vadd.f32 %v297, %v375
        %377 = vmatmul.f32.gmra.mxu0 %v331
        %v378 = vpop.f32.mrf.mxu0
        %v379 = vadd.f32 %v297, %v378
        %380 = vmatmul.f32.gmra.mxu0 %v334
        %v381 = vpop.f32.mrf.mxu0
        %v382 = vadd.f32 %v297, %v381
        %383 = vdwg.mxu0
        %384 = vmatpush.msra.mxu0 0.0
        %385 = vmatpush.msra.mxu0 0.0
        %386 = vmatpush.msra.mxu0 0.0
        %387 = vmatpush.msra.mxu0 0.0
        %388 = vmatpush.msra.mxu0 0.0
        %389 = vmatpush.msra.mxu0 0.0
        %390 = vmatpush.msra.mxu0 0.0
        %391 = vmatpush.msra.mxu0 0.0
        %392 = vmatpush.msra.mxu0 0.0
        %393 = vmatpush.msra.mxu0 0.0
        %394 = vmatpush.msra.mxu0 0.0
        %395 = vmatpush.msra.mxu0 0.0
        %396 = vmatpush.msra.mxu0 0.0
        %397 = vmatpush.msra.mxu0 0.0
        %398 = vmatpush.msra.mxu0 0.0
        %399 = vmatpush.msra.mxu0 %v339
        %400 = vmatmul.f32.gmra.mxu0 %v313
        %v401 = vpop.f32.mrf.mxu0
        %v402 = vadd.f32 %v298, %v401
        %403 = vmatmul.f32.gmra.mxu0 %v316
        %v404 = vpop.f32.mrf.mxu0
        %v405 = vadd.f32 %v298, %v404
        %406 = vmatmul.f32.gmra.mxu0 %v319
        %v407 = vpop.f32.mrf.mxu0
        %v408 = vadd.f32 %v298, %v407
        %409 = vmatmul.f32.gmra.mxu0 %v322
        %v410 = vpop.f32.mrf.mxu0
        %v411 = vadd.f32 %v298, %v410
        %412 = vmatmul.f32.gmra.mxu0 %v325
        %v413 = vpop.f32.mrf.mxu0
        %v414 = vadd.f32 %v298, %v413
        %415 = vmatmul.f32.gmra.mxu0 %v328
        %v416 = vpop.f32.mrf.mxu0
        %v417 = vadd.f32 %v298, %v416
        %418 = vmatmul.f32.gmra.mxu0 %v331
        %v419 = vpop.f32.mrf.mxu0
        %v420 = vadd.f32 %v298, %v419
        %421 = vmatmul.f32.gmra.mxu0 %v334
        %v422 = vpop.f32.mrf.mxu0
        %v423 = vadd.f32 %v298, %v422
        %424 = vdwg.mxu0
        %425 = vmatpush.msra.mxu0 0.0
        %426 = vmatpush.msra.mxu0 0.0
        %427 = vmatpush.msra.mxu0 0.0
        %428 = vmatpush.msra.mxu0 0.0
        %429 = vmatpush.msra.mxu0 0.0
        %430 = vmatpush.msra.mxu0 0.0
        %431 = vmatpush.msra.mxu0 0.0
        %432 = vmatpush.msra.mxu0 0.0
        %433 = vmatpush.msra.mxu0 0.0
        %434 = vmatpush.msra.mxu0 0.0
        %435 = vmatpush.msra.mxu0 0.0
        %436 = vmatpush.msra.mxu0 0.0
        %437 = vmatpush.msra.mxu0 0.0
        %438 = vmatpush.msra.mxu0 0.0
        %439 = vmatpush.msra.mxu0 0.0
        %440 = vmatpush.msra.mxu0 %v341
        %441 = vmatmul.f32.gmra.mxu0 %v313
        %v442 = vpop.f32.mrf.mxu0
        %v443 = vadd.f32 %v299, %v442
        %444 = vmatmul.f32.gmra.mxu0 %v316
        %v445 = vpop.f32.mrf.mxu0
        %v446 = vadd.f32 %v299, %v445
        %447 = vmatmul.f32.gmra.mxu0 %v319
        %v448 = vpop.f32.mrf.mxu0
        %v449 = vadd.f32 %v299, %v448
        %450 = vmatmul.f32.gmra.mxu0 %v322
        %v451 = vpop.f32.mrf.mxu0
        %v452 = vadd.f32 %v299, %v451
        %453 = vmatmul.f32.gmra.mxu0 %v325
        %v454 = vpop.f32.mrf.mxu0
        %v455 = vadd.f32 %v299, %v454
        %456 = vmatmul.f32.gmra.mxu0 %v328
        %v457 = vpop.f32.mrf.mxu0
        %v458 = vadd.f32 %v299, %v457
        %459 = vmatmul.f32.gmra.mxu0 %v331
        %v460 = vpop.f32.mrf.mxu0
        %v461 = vadd.f32 %v299, %v460
        %462 = vmatmul.f32.gmra.mxu0 %v334
        %v463 = vpop.f32.mrf.mxu0
        %v464 = vadd.f32 %v299, %v463
        %465 = vdwg.mxu0
        %v466 = vmax.f32 %v361, 0.0
        %v467 = vmax.f32 %v364, 0.0
        %v468 = vmax.f32 %v367, 0.0
        %v469 = vmax.f32 %v370, 0.0
        %v470 = vmax.f32 %v373, 0.0
        %v471 = vmax.f32 %v376, 0.0
        %v472 = vmax.f32 %v379, 0.0
        %v473 = vmax.f32 %v382, 0.0
        %v474 = vld [vmem:[%s3] sm:$0xff]
        %v475 = vld [vmem:[%s3 + $0x8] sm:$0xff]
        %v476 = vld [vmem:[%s3 + $0x10] sm:$0xff]
        %v477 = vld [vmem:[%s3 + $0x18] sm:$0xff]
        %v478 = vld [vmem:[%s3 + $0x20] sm:$0xff]
        %v479 = vld [vmem:[%s3 + $0x28] sm:$0xff]
        %v480 = vld [vmem:[%s3 + $0x30] sm:$0xff]
        %v481 = vld [vmem:[%s3 + $0x38] sm:$0xff]
        %v482 = vld [vmem:[%s3 + $0x40] sm:$0xff]
        %v483 = vld [vmem:[%s3 + $0x48] sm:$0xff]
        %v484 = vld [vmem:[%s3 + $0x50] sm:$0xff]
        %v485 = vld [vmem:[%s3 + $0x58] sm:$0xff]
        %v486 = vld [vmem:[%s3 + $0x60] sm:$0xff]
        %v487 = vld [vmem:[%s3 + $0x68] sm:$0xff]
        %v488 = vld [vmem:[%s3 + $0x70] sm:$0xff]
        %v489 = vld [vmem:[%s3 + $0x78] sm:$0xff]
        %490 = vmatpush.msra.mxu0 %v489
        %491 = vmatpush.msra.mxu0 %v488
        %492 = vmatpush.msra.mxu0 %v487
        %493 = vmatpush.msra.mxu0 %v486
        %494 = vmatpush.msra.mxu0 %v485
        %495 = vmatpush.msra.mxu0 %v484
        %496 = vmatpush.msra.mxu0 %v483
        %497 = vmatpush.msra.mxu0 %v482
        %498 = vmatpush.msra.mxu0 %v481
        %499 = vmatpush.msra.mxu0 %v480
        %500 = vmatpush.msra.mxu0 %v479
        %501 = vmatpush.msra.mxu0 %v478
        %502 = vmatpush.msra.mxu0 %v477
        %503 = vmatpush.msra.mxu0 %v476
        %504 = vmatpush.msra.mxu0 %v475
        %505 = vmatpush.msra.mxu0 %v474
        %506 = vmatmul.f32.gmra.mxu0 %v466
        %v507 = vpop.f32.mrf.mxu0
        %v508 = vadd.f32 %v402, %v507
        %509 = vmatmul.f32.gmra.mxu0 %v467
        %v510 = vpop.f32.mrf.mxu0
        %v511 = vadd.f32 %v405, %v510
        %512 = vmatmul.f32.gmra.mxu0 %v468
        %v513 = vpop.f32.mrf.mxu0
        %v514 = vadd.f32 %v408, %v513
        %515 = vmatmul.f32.gmra.mxu0 %v469
        %v516 = vpop.f32.mrf.mxu0
        %v517 = vadd.f32 %v411, %v516
        %518 = vmatmul.f32.gmra.mxu0 %v470
        %v519 = vpop.f32.mrf.mxu0
        %v520 = vadd.f32 %v414, %v519
        %521 = vmatmul.f32.gmra.mxu0 %v471
        %v522 = vpop.f32.mrf.mxu0
        %v523 = vadd.f32 %v417, %v522
        %524 = vmatmul.f32.gmra.mxu0 %v472
        %v525 = vpop.f32.mrf.mxu0
        %v526 = vadd.f32 %v420, %v525
        %527 = vmatmul.f32.gmra.mxu0 %v473
        %v528 = vpop.f32.mrf.mxu0
        %v529 = vadd.f32 %v423, %v528
        %530 = vdwg.mxu0
        %v531 = vmax.f32 %v508, 0.0
        %v532 = vmax.f32 %v511, 0.0
        %v533 = vmax.f32 %v514, 0.0
        %v534 = vmax.f32 %v517, 0.0
        %v535 = vmax.f32 %v520, 0.0
        %v536 = vmax.f32 %v523, 0.0
        %v537 = vmax.f32 %v526, 0.0
        %v538 = vmax.f32 %v529, 0.0
        %v539 = vld [vmem:[#allocation5] sm:$0xff]
        %v540 = vld [vmem:[#allocation5 + $0x8] sm:$0xff]
        %v541 = vld [vmem:[#allocation5 + $0x10] sm:$0xff]
        %v542 = vld [vmem:[#allocation5 + $0x18] sm:$0xff]
        %v543 = vld [vmem:[#allocation5 + $0x20] sm:$0xff]
        %v544 = vld [vmem:[#allocation5 + $0x28] sm:$0xff]
        %v545 = vld [vmem:[#allocation5 + $0x30] sm:$0xff]
        %v546 = vld [vmem:[#allocation5 + $0x38] sm:$0xff]
        %v547 = vld [vmem:[#allocation5 + $0x40] sm:$0xff]
        %v548 = vld [vmem:[#allocation5 + $0x48] sm:$0xff]
        %v549 = vld [vmem:[#allocation5 + $0x50] sm:$0xff]
        %v550 = vld [vmem:[#allocation5 + $0x58] sm:$0xff]
        %v551 = vld [vmem:[#allocation5 + $0x60] sm:$0xff]
        %v552 = vld [vmem:[#allocation5 + $0x68] sm:$0xff]
        %v553 = vld [vmem:[#allocation5 + $0x70] sm:$0xff]
        %v554 = vld [vmem:[#allocation5 + $0x78] sm:$0xff]
        %555 = vmatpush.msra.mxu0 %v554
        %556 = vmatpush.msra.mxu0 %v553
        %557 = vmatpush.msra.mxu0 %v552
        %558 = vmatpush.msra.mxu0 %v551
        %559 = vmatpush.msra.mxu0 %v550
        %560 = vmatpush.msra.mxu0 %v549
        %561 = vmatpush.msra.mxu0 %v548
        %562 = vmatpush.msra.mxu0 %v547
        %563 = vmatpush.msra.mxu0 %v546
        %564 = vmatpush.msra.mxu0 %v545
        %565 = vmatpush.msra.mxu0 %v544
        %566 = vmatpush.msra.mxu0 %v543
        %567 = vmatpush.msra.mxu0 %v542
        %568 = vmatpush.msra.mxu0 %v541
        %569 = vmatpush.msra.mxu0 %v540
        %570 = vmatpush.msra.mxu0 %v539
        %571 = vmatmul.f32.gmra.mxu0 %v531
        %v572 = vpop.f32.mrf.mxu0
        %v573 = vadd.f32 %v443, %v572
        %574 = vmatmul.f32.gmra.mxu0 %v532
        %v575 = vpop.f32.mrf.mxu0
        %v576 = vadd.f32 %v446, %v575
        %577 = vmatmul.f32.gmra.mxu0 %v533
        %v578 = vpop.f32.mrf.mxu0
        %v579 = vadd.f32 %v449, %v578
        %580 = vmatmul.f32.gmra.mxu0 %v534
        %v581 = vpop.f32.mrf.mxu0
        %v582 = vadd.f32 %v452, %v581
        %583 = vmatmul.f32.gmra.mxu0 %v535
        %v584 = vpop.f32.mrf.mxu0
        %v585 = vadd.f32 %v455, %v584
        %586 = vmatmul.f32.gmra.mxu0 %v536
        %v587 = vpop.f32.mrf.mxu0
        %v588 = vadd.f32 %v458, %v587
        %589 = vmatmul.f32.gmra.mxu0 %v537
        %v590 = vpop.f32.mrf.mxu0
        %v591 = vadd.f32 %v461, %v590
        %592 = vmatmul.f32.gmra.mxu0 %v538
        %v593 = vpop.f32.mrf.mxu0
        %v594 = vadd.f32 %v464, %v593
        %595 = vdwg.mxu0
        %v596 = vmax.f32 %v573, 0.0
        %v597 = vmax.f32 %v576, 0.0
        %v598 = vmax.f32 %v579, 0.0
        %v599 = vmax.f32 %v582, 0.0
        %v600 = vmax.f32 %v585, 0.0
        %v601 = vmax.f32 %v588, 0.0
        %v602 = vmax.f32 %v591, 0.0
        %v603 = vmax.f32 %v594, 0.0
        %v604 = vld [vmem:[%s5] sm:$0x1]
        %v606 = vperm.slane %v604, 0
        %v608 = vsub.f32 %v596, %v606
        %v609 = vsub.f32 %v597, %v606
        %v610 = vsub.f32 %v598, %v606
        %v611 = vsub.f32 %v599, %v606
        %v612 = vsub.f32 %v600, %v606
        %v613 = vsub.f32 %v601, %v606
        %v614 = vsub.f32 %v602, %v606
        %v615 = vsub.f32 %v603, %v606
        %v616 = vmax.f32 %v608, 0.0
        %v617 = vmax.f32 %v609, 0.0
        %v618 = vmax.f32 %v610, 0.0
        %v619 = vmax.f32 %v611, 0.0
        %v620 = vmax.f32 %v612, 0.0
        %v621 = vmax.f32 %v613, 0.0
        %v622 = vmax.f32 %v614, 0.0
        %v623 = vmax.f32 %v615, 0.0
        %v624 = vmul.f32 %v616, %v616
        %v625 = vmul.f32 %v617, %v617
        %v626 = vmul.f32 %v618, %v618
        %v627 = vmul.f32 %v619, %v619
        %v628 = vmul.f32 %v620, %v620
        %v629 = vmul.f32 %v621, %v621
        %v630 = vmul.f32 %v622, %v622
        %v631 = vmul.f32 %v623, %v623
        %v632 = vmul.f32 %v624, 0.5
        %v633 = vmul.f32 %v625, 0.5
        %v634 = vmul.f32 %v626, 0.5
        %v635 = vmul.f32 %v627, 0.5
        %v636 = vmul.f32 %v628, 0.5
        %v637 = vmul.f32 %v629, 0.5
        %v638 = vmul.f32 %v630, 0.5
        %v639 = vmul.f32 %v631, 0.5
        %v640 = vmin.f32 %v632, 0.5
        %v641 = vmin.f32 %v633, 0.5
        %v642 = vmin.f32 %v634, 0.5
        %v643 = vmin.f32 %v635, 0.5
        %v644 = vmin.f32 %v636, 0.5
        %v645 = vmin.f32 %v637, 0.5
        %v646 = vmin.f32 %v638, 0.5
        %v647 = vmin.f32 %v639, 0.5
        %v648 = vsub.f32 %v608, 0.5
        %v649 = vsub.f32 %v609, 0.5
        %v650 = vsub.f32 %v610, 0.5
        %v651 = vsub.f32 %v611, 0.5
        %v652 = vsub.f32 %v612, 0.5
        %v653 = vsub.f32 %v613, 0.5
        %v654 = vsub.f32 %v614, 0.5
        %v655 = vsub.f32 %v615, 0.5
        %v656 = vmax.f32 %v640, %v648
        %v657 = vmax.f32 %v641, %v649
        %v658 = vmax.f32 %v642, %v650
        %v659 = vmax.f32 %v643, %v651
        %v660 = vmax.f32 %v644, %v652
        %v661 = vmax.f32 %v645, %v653
        %v662 = vmax.f32 %v646, %v654
        %v663 = vmax.f32 %v647, %v655
        %v664 = vmul.f32 %v285, %v285
        %v665 = vmul.f32 %v286, %v286
        %v666 = vmul.f32 %v287, %v287
        %v667 = vmul.f32 %v288, %v288
        %v668 = vmul.f32 %v289, %v289
        %v669 = vmul.f32 %v290, %v290
        %v670 = vmul.f32 %v291, %v291
        %v671 = vmul.f32 %v292, %v292
        %v672 = vsel %vm311, %v664, 0.0
        %673 = vadd.xlane.f32.xlu0 %v672
        %v674 = vpop.xlane.xlu0 %673
        %v675 = vsel %vm311, %v665, 0.0
        %676 = vadd.xlane.f32.xlu0 %v675
        %v677 = vpop.xlane.xlu0 %676
        %v678 = vsel %vm311, %v666, 0.0
        %679 = vadd.xlane.f32.xlu0 %v678
        %v680 = vpop.xlane.xlu0 %679
        %v681 = vsel %vm311, %v667, 0.0
        %682 = vadd.xlane.f32.xlu0 %v681
        %v683 = vpop.xlane.xlu0 %682
        %v684 = vsel %vm311, %v668, 0.0
        %685 = vadd.xlane.f32.xlu0 %v684
        %v686 = vpop.xlane.xlu0 %685
        %v687 = vsel %vm311, %v669, 0.0
        %688 = vadd.xlane.f32.xlu0 %v687
        %v689 = vpop.xlane.xlu0 %688
        %v690 = vsel %vm311, %v670, 0.0
        %691 = vadd.xlane.f32.xlu0 %v690
        %v692 = vpop.xlane.xlu0 %691
        %v693 = vsel %vm311, %v671, 0.0
        %694 = vadd.xlane.f32.xlu0 %v693
        %v695 = vpop.xlane.xlu0 %694
        %v696 = vmul.f32 %v674, 0.01
        %v697 = vmul.f32 %v677, 0.01
        %v698 = vmul.f32 %v680, 0.01
        %v699 = vmul.f32 %v683, 0.01
        %v700 = vmul.f32 %v686, 0.01
        %v701 = vmul.f32 %v689, 0.01
        %v702 = vmul.f32 %v692, 0.01
        %v703 = vmul.f32 %v695, 0.01
        %v704 = vadd.f32 %v656, %v696
        %v705 = vadd.f32 %v657, %v697
        %v706 = vadd.f32 %v658, %v698
        %v707 = vadd.f32 %v659, %v699
        %v708 = vadd.f32 %v660, %v700
        %v709 = vadd.f32 %v661, %v701
        %v710 = vadd.f32 %v662, %v702
        %v711 = vadd.f32 %v663, %v703
        %712 = vst [vmem:[%s277] sm:$0xff] %v704
        %713 = vst [vmem:[%s277 + $0x8] sm:$0xff] %v705
        %714 = vst [vmem:[%s277 + $0x10] sm:$0xff] %v706
        %715 = vst [vmem:[%s277 + $0x18] sm:$0xff] %v707
        %716 = vst [vmem:[%s277 + $0x20] sm:$0xff] %v708
        %717 = vst [vmem:[%s277 + $0x28] sm:$0xff] %v709
        %718 = vst [vmem:[%s277 + $0x30] sm:$0xff] %v710
        %719 = vst [vmem:[%s277 + $0x38] sm:$0xff] %v711
        %s720 = sand.u32 %s161, 1
        %s721 = scalar_lea.sflag [#allocation4], %s720
        %s722 = sand.u32 %s161, 1
        %s723 = smul.addr %s722, 64
        %s724 = scalar_lea.vmem [#allocation7], %s723
        // Predicated region
        $region53: #{tpu_custom_call.1} parent=43 // pred_check
          %p725 = pneg %p171
        $region54: #{tpu_custom_call.1} parent=43 // pred_check_branch
          %727 = sbr.rel (%p725) target = $region56
        $region55: #{tpu_custom_call.1} parent=43 // pred_region
          %s728 = smul.u32 8, %s22
          %730 = vsyncadd %s721, 0
          %s731 = smul.addr %s728, 8
          %s732 = scalar_lea.hbm %s6, %s731
          %s733 = sshll.u32 %s724, 4
          %s734 = int_to_ptr.vmem [resolvable:$true] %s733
          %s735 = sshll.u32 %s732, 4
          %s736 = int_to_ptr.hbm [resolvable:$true] %s735
          %741 = dma.vmem_to_hbm [thread:$0]  %s734, 1024, %s736, %s721, 128, 128, 8
        $region56: #{tpu_custom_call.1} parent=43 // pred_fallthru
          _
      $region44: #{tpu_custom_call.1} parent=5 // pred_fallthru
        _
      %p742 = scmp.le.s32.totalorder 2, %s17
      // Predicated region
      $region57: #{tpu_custom_call.1} parent=5 // pred_check
        %p743 = pneg %p742
      $region58: #{tpu_custom_call.1} parent=5 // pred_check_branch
        %745 = sbr.rel (%p743) target = $region60
      $region59: #{tpu_custom_call.1} parent=5 // pred_region
        %s746 = ssub.s32 %s17, 2
        // Predicated region
        $region61: #{tpu_custom_call.1} parent=59 // pred_check
          %p747 = pneg %p177
        $region62: #{tpu_custom_call.1} parent=59 // pred_check_branch
          %749 = sbr.rel (%p747) target = $region64
        $region63: #{tpu_custom_call.1} parent=59 // pred_region
          %s750 = sand.u32 %s162, 1
          %s751 = scalar_lea.sflag [#allocation4], %s750
          %s752 = sand.u32 %s162, 1
          %s753 = smul.addr %s752, 64
          %s754 = scalar_lea.vmem [#allocation7], %s753
          %756 = dma.done %s751, 1024
        $region64: #{tpu_custom_call.1} parent=59 // pred_fallthru
          _
      $region60: #{tpu_custom_call.1} parent=5 // pred_fallthru
        _
    $region6: #{tpu_custom_call.1} parent=1 // loop_footer
      %s21 = sadd.s32 1, %s17
    $region7: #{tpu_custom_call.1} parent=1 // loop_footer_branch
      %16 = sbr.rel target = $region3
    $region8: #{tpu_custom_call.1} parent=1 // loop_exit
      _
    %757 = vsyncpa [#allocation3], 1
    %s758 = scalar_lea.sflag [#allocation3], 1
    %759 = vsyncpa %s758, 1
    %760 = vsyncpa [#allocation6], 1
    %761 = vsyncpa [#allocation4], 1
    %s762 = scalar_lea.sflag [#allocation4], 1
    %763 = vsyncpa %s762, 1

</llo_original>
